<compile_context>
chip_gen: v7x
topology: tpu7x:2x2x1
jax: 0.10.0
libtpu: 0.0.40
codegen_flags: <defaults>
</compile_context>

<pallas_src>
import numpy as np
import jax
import jax.numpy as jnp
from jax.experimental import pallas as pl
from jax.experimental.pallas import tpu as pltpu

FEAT_PAD = 128  # lane width; all hidden/feature dims are zero-padded to this


def _round_up(x, m):
    return (x + m - 1) // m * m


# ----------------------------- kernel ---------------------------------------


def critic2_kernel(state_ref, action_ref, ws_ref, wa_ref, wmlp_ref, b_ref, out_ref):
    # Fused block-diagonal input layer: inp1..inp4 + concat in one shot.
    z = (jnp.dot(state_ref[...], ws_ref[...], preferred_element_type=jnp.float32)
         + jnp.dot(action_ref[...], wa_ref[...], preferred_element_type=jnp.float32)
         + b_ref[0:1, :])
    h = jnp.maximum(z, 0.0)                      # (TB, 128); cols >= 2S+2A stay 0

    # fcs1 -> fc2 -> fc3 (Critic2 ReLUs the head too); all outputs padded
    # to 128 lanes with zero weights/biases, so padded lanes remain 0.
    for l in range(3):                           # unrolled at trace time
        z = (jnp.dot(h, wmlp_ref[l], preferred_element_type=jnp.float32)
             + b_ref[l + 1:l + 2, :])
        h = jnp.maximum(z, 0.0)

    out_ref[...] = h.astype(out_ref.dtype)       # lane-dense (TB, 128) store


# ------------------------- host-side packing --------------------------------


def build_packed_params(params, state_size, action_size, hidden_layers):
    """Pack the 14 Critic2 tensors into 4 padded, lane-dense operands."""
    (w1, b1, w2, b2, w3, b3, w4, b4, wf1, bf1, wf2, bf2, wf3, bf3) = params
    S, A = state_size, action_size
    H0, H1 = hidden_layers
    F = FEAT_PAD
    assert 2 * S + 2 * A <= F and H0 <= F and H1 <= F

    # Block-diagonal input projection, split into a state part and action part.
    Ws = jnp.zeros((2 * S, F), jnp.float32)
    Ws = Ws.at[0:S, 0:S].set(w1).at[S:2 * S, S:2 * S].set(w2)
    Wa = jnp.zeros((2 * A, F), jnp.float32)
    Wa = Wa.at[0:A, 2 * S:2 * S + A].set(w3)
    Wa = Wa.at[A:2 * A, 2 * S + A:2 * S + 2 * A].set(w4)

    # MLP weight slab: (layer, in_pad, out_pad) with zero padding.
    Wmlp = jnp.zeros((3, F, F), jnp.float32)
    Wmlp = Wmlp.at[0, 0:2 * S + 2 * A, 0:H0].set(wf1)
    Wmlp = Wmlp.at[1, 0:H0, 0:H1].set(wf2)
    Wmlp = Wmlp.at[2, 0:H1, 0:1].set(wf3)

    # Bias slab: row 0 = fused input-layer bias, rows 1..3 = fcs1/fc2/fc3.
    Ball = jnp.zeros((4, F), jnp.float32)
    Ball = Ball.at[0, 0:S].set(b1.reshape(-1))
    Ball = Ball.at[0, S:2 * S].set(b2.reshape(-1))
    Ball = Ball.at[0, 2 * S:2 * S + A].set(b3.reshape(-1))
    Ball = Ball.at[0, 2 * S + A:2 * S + 2 * A].set(b4.reshape(-1))
    Ball = Ball.at[1, 0:H0].set(bf1.reshape(-1))
    Ball = Ball.at[2, 0:H1].set(bf2.reshape(-1))
    Ball = Ball.at[3, 0:1].set(bf3.reshape(-1))
    return Ws, Wa, Wmlp, Ball


# ----------------------------- wrapper ---------------------------------------


def critic2_forward(state, action, packed, *, block_b=256):
    """Batch-tiled Pallas forward. Returns (B, 1) Q-values."""
    Ws, Wa, Wmlp, Ball = packed
    B = state.shape[0]
    F = Ws.shape[1]

    tb = min(block_b, _round_up(B, 8))      # f32 sublane granularity = 8
    Bp = _round_up(B, tb)
    if Bp != B:
        state = jnp.pad(state, ((0, Bp - B), (0, 0)))
        action = jnp.pad(action, ((0, Bp - B), (0, 0)))

    out = pl.pallas_call(
        critic2_kernel,
        out_shape=jax.ShapeDtypeStruct((Bp, F), jnp.float32),
        grid=(Bp // tb,),
        in_specs=[
            pl.BlockSpec((tb, state.shape[1]), lambda i: (i, 0)),     # state tile
            pl.BlockSpec((tb, action.shape[1]), lambda i: (i, 0)),    # action tile
            pl.BlockSpec(Ws.shape, lambda i: (0, 0)),                 # resident
            pl.BlockSpec(Wa.shape, lambda i: (0, 0)),                 # resident
            pl.BlockSpec(Wmlp.shape, lambda i: (0, 0, 0)),            # resident
            pl.BlockSpec(Ball.shape, lambda i: (0, 0)),               # resident
        ],
        out_specs=pl.BlockSpec((tb, F), lambda i: (i, 0)),
        compiler_params=pltpu.CompilerParams(
            dimension_semantics=("parallel",)),
    )(state, action, Ws, Wa, Wmlp, Ball)

    return out[:B, :1]   # Q-value lives in column 0 of the lane-dense output


# -------------------------- init & reference ---------------------------------


def init_params(key, state_size, action_size, hidden_layers):
    """Deterministic synthetic init mirroring PyTorch's reset_parameters()."""
    def uniform(k, shape, lim):
        return jax.random.uniform(k, shape, jnp.float32, -lim, lim)

    keys = jax.random.split(key, 14)
    input_dim = state_size * 2 + action_size * 2
    params = []

    def make_linear(kw, kb, in_f, out_f, w_lim=None):
        # hidden_init uses weight.size()[0] == out_features in PyTorch layout
        lim_w = (1.0 / np.sqrt(out_f)) if w_lim is None else w_lim
        lim_b = 1.0 / np.sqrt(in_f)    # PyTorch default bias init range
        w = uniform(kw, (in_f, out_f), lim_w)          # stored as (in, out)
        b = uniform(kb, (1, out_f), lim_b)
        params.extend([w, b])

    make_linear(keys[0], keys[1], state_size, state_size)                # inp1
    make_linear(keys[2], keys[3], state_size, state_size)                # inp2
    make_linear(keys[4], keys[5], action_size, action_size)              # inp3
    make_linear(keys[6], keys[7], action_size, action_size)              # inp4
    make_linear(keys[8], keys[9], input_dim, hidden_layers[0])           # fcs1
    make_linear(keys[10], keys[11], hidden_layers[0], hidden_layers[1])  # fc2
    make_linear(keys[12], keys[13], hidden_layers[1], 1, w_lim=0.003)    # fc3
    return params


def reference_forward(state, action, params, state_size, action_size):
    (w1, b1, w2, b2, w3, b3, w4, b4, wf1, bf1, wf2, bf2, wf3, bf3) = params
    relu = lambda x: jnp.maximum(x, 0.0)
    s1, s2 = state[:, :state_size], state[:, state_size:]
    a1, a2 = action[:, :action_size], action[:, action_size:]
    x1 = relu(s1 @ w1 + b1)
    x2 = relu(s2 @ w2 + b2)
    x3 = relu(a1 @ w3 + b3)
    x4 = relu(a2 @ w4 + b4)
    xall = jnp.concatenate([x1, x2, x3, x4], axis=1)
    h1 = relu(xall @ wf1 + bf1)
    h2 = relu(h1 @ wf2 + bf2)
    return relu(h2 @ wf3 + bf3)


# ------------------------------- main ----------------------------------------


if __name__ == "__main__":
    state_size = 16
    action_size = 8
    hidden_layers = [64, 32]
    batch = 8

    key = jax.random.PRNGKey(0)
    k_state, k_action, k_params = jax.random.split(key, 3)

    state = jax.random.normal(k_state, (batch, 2 * state_size), jnp.float32)
    action = jax.random.normal(k_action, (batch, 2 * action_size), jnp.float32)
    params = init_params(k_params, state_size, action_size, hidden_layers)
    packed = build_packed_params(params, state_size, action_size, hidden_layers)

    # Small-batch check (grid of 1).
    out = critic2_forward(state, action, packed)
    out = jax.block_until_ready(out)
    ref = reference_forward(state, action, params, state_size, action_size)
    np.testing.assert_allclose(np.asarray(out), np.asarray(ref), rtol=1e-5, atol=1e-5)

    # Larger, non-multiple batch to exercise batch tiling + padding (grid > 1).
    k_s2, k_a2 = jax.random.split(jax.random.PRNGKey(1), 2)
    big_b = 100
    state_b = jax.random.normal(k_s2, (big_b, 2 * state_size), jnp.float32)
    action_b = jax.random.normal(k_a2, (big_b, 2 * action_size), jnp.float32)
    out_b = critic2_forward(state_b, action_b, packed, block_b=64)
    out_b = jax.block_until_ready(out_b)
    ref_b = reference_forward(state_b, action_b, params, state_size, action_size)
    np.testing.assert_allclose(np.asarray(out_b), np.asarray(ref_b), rtol=1e-5, atol=1e-5)

    print("KERNEL_OK")
</pallas_src>

<mosaic_0001>
module attributes {stable_mosaic.version = 11 : i64} {
  func.func @critic2_kernel(%arg0: i32, %arg1: memref<8x32xf32, #tpu.memory_space<vmem>>, %arg2: memref<8x16xf32, #tpu.memory_space<vmem>>, %arg3: memref<32x128xf32, #tpu.memory_space<vmem>>, %arg4: memref<16x128xf32, #tpu.memory_space<vmem>>, %arg5: memref<3x128x128xf32, #tpu.memory_space<vmem>>, %arg6: memref<4x128xf32, #tpu.memory_space<vmem>>, %arg7: memref<8x128xf32, #tpu.memory_space<vmem>>) attributes {dimension_semantics = [#tpu.dimension_semantics<parallel>], iteration_bounds = array<i64: 1>, scalar_prefetch = 0 : i64, scratch_operands = 0 : i64, tpu.core_type = #tpu.core_type<tc>, window_params = [{transform_indices = @transform_0, window_bounds = array<i64: 8, 32>}, {transform_indices = @transform_1, window_bounds = array<i64: 8, 16>}, {pipeline_mode = #tpu.pipeline_mode<synchronous>, transform_indices = @transform_2, window_bounds = array<i64: 32, 128>}, {pipeline_mode = #tpu.pipeline_mode<synchronous>, transform_indices = @transform_3, window_bounds = array<i64: 16, 128>}, {pipeline_mode = #tpu.pipeline_mode<synchronous>, transform_indices = @transform_4, window_bounds = array<i64: 3, 128, 128>}, {pipeline_mode = #tpu.pipeline_mode<synchronous>, transform_indices = @transform_5, window_bounds = array<i64: 4, 128>}, {transform_indices = @transform_6, window_bounds = array<i64: 8, 128>}]} {
    %c0 = arith.constant 0 : index
    %c0_0 = arith.constant 0 : index
    %0 = vector.load %arg1[%c0, %c0_0] : memref<8x32xf32, #tpu.memory_space<vmem>>, vector<8x32xf32>
    %c0_1 = arith.constant 0 : index
    %c0_2 = arith.constant 0 : index
    %1 = vector.load %arg3[%c0_1, %c0_2] : memref<32x128xf32, #tpu.memory_space<vmem>>, vector<32x128xf32>
    %cst = arith.constant dense<0.000000e+00> : vector<8x128xf32>
    %2 = tpu.matmul %0, %1, %cst {dimension_numbers = #tpu.dot_dimension_numbers<[1], [0], [0], [1], [0, 0, 1, 1], [], []>} : vector<8x32xf32>, vector<32x128xf32>, vector<8x128xf32> -> vector<8x128xf32>
    %c0_3 = arith.constant 0 : index
    %c0_4 = arith.constant 0 : index
    %3 = vector.load %arg2[%c0_3, %c0_4] : memref<8x16xf32, #tpu.memory_space<vmem>>, vector<8x16xf32>
    %c0_5 = arith.constant 0 : index
    %c0_6 = arith.constant 0 : index
    %4 = vector.load %arg4[%c0_5, %c0_6] : memref<16x128xf32, #tpu.memory_space<vmem>>, vector<16x128xf32>
    %cst_7 = arith.constant dense<0.000000e+00> : vector<8x128xf32>
    %5 = tpu.matmul %3, %4, %cst_7 {dimension_numbers = #tpu.dot_dimension_numbers<[1], [0], [0], [1], [0, 0, 1, 1], [], []>} : vector<8x16xf32>, vector<16x128xf32>, vector<8x128xf32> -> vector<8x128xf32>
    %6 = arith.addf %2, %5 : vector<8x128xf32>
    %c0_8 = arith.constant 0 : index
    %c0_9 = arith.constant 0 : index
    %7 = vector.load %arg6[%c0_8, %c0_9] : memref<4x128xf32, #tpu.memory_space<vmem>>, vector<1x128xf32>
    %8 = vector.broadcast %7 : vector<1x128xf32> to vector<8x128xf32>
    %9 = arith.addf %6, %8 : vector<8x128xf32>
    %cst_10 = arith.constant 0.000000e+00 : f32
    %10 = vector.broadcast %cst_10 : f32 to vector<8x128xf32>
    %11 = arith.maximumf %9, %10 : vector<8x128xf32>
    %c0_11 = arith.constant 0 : index
    %c0_12 = arith.constant 0 : index
    %c0_13 = arith.constant 0 : index
    %12 = vector.load %arg5[%c0_11, %c0_12, %c0_13] : memref<3x128x128xf32, #tpu.memory_space<vmem>>, vector<1x128x128xf32>
    %13 = vector.shape_cast %12 : vector<1x128x128xf32> to vector<128x128xf32>
    %cst_14 = arith.constant dense<0.000000e+00> : vector<8x128xf32>
    %14 = tpu.matmul %11, %13, %cst_14 {dimension_numbers = #tpu.dot_dimension_numbers<[1], [0], [0], [1], [0, 0, 1, 1], [], []>} : vector<8x128xf32>, vector<128x128xf32>, vector<8x128xf32> -> vector<8x128xf32>
    %c1 = arith.constant 1 : index
    %c0_15 = arith.constant 0 : index
    %15 = vector.load %arg6[%c1, %c0_15] : memref<4x128xf32, #tpu.memory_space<vmem>>, vector<1x128xf32>
    %16 = vector.broadcast %15 : vector<1x128xf32> to vector<8x128xf32>
    %17 = arith.addf %14, %16 : vector<8x128xf32>
    %cst_16 = arith.constant 0.000000e+00 : f32
    %18 = vector.broadcast %cst_16 : f32 to vector<8x128xf32>
    %19 = arith.maximumf %17, %18 : vector<8x128xf32>
    %c1_17 = arith.constant 1 : index
    %c0_18 = arith.constant 0 : index
    %c0_19 = arith.constant 0 : index
    %20 = vector.load %arg5[%c1_17, %c0_18, %c0_19] : memref<3x128x128xf32, #tpu.memory_space<vmem>>, vector<1x128x128xf32>
    %21 = vector.shape_cast %20 : vector<1x128x128xf32> to vector<128x128xf32>
    %cst_20 = arith.constant dense<0.000000e+00> : vector<8x128xf32>
    %22 = tpu.matmul %19, %21, %cst_20 {dimension_numbers = #tpu.dot_dimension_numbers<[1], [0], [0], [1], [0, 0, 1, 1], [], []>} : vector<8x128xf32>, vector<128x128xf32>, vector<8x128xf32> -> vector<8x128xf32>
    %c2 = arith.constant 2 : index
    %c0_21 = arith.constant 0 : index
    %23 = vector.load %arg6[%c2, %c0_21] : memref<4x128xf32, #tpu.memory_space<vmem>>, vector<1x128xf32>
    %24 = vector.broadcast %23 : vector<1x128xf32> to vector<8x128xf32>
    %25 = arith.addf %22, %24 : vector<8x128xf32>
    %cst_22 = arith.constant 0.000000e+00 : f32
    %26 = vector.broadcast %cst_22 : f32 to vector<8x128xf32>
    %27 = arith.maximumf %25, %26 : vector<8x128xf32>
    %c2_23 = arith.constant 2 : index
    %c0_24 = arith.constant 0 : index
    %c0_25 = arith.constant 0 : index
    %28 = vector.load %arg5[%c2_23, %c0_24, %c0_25] : memref<3x128x128xf32, #tpu.memory_space<vmem>>, vector<1x128x128xf32>
    %29 = vector.shape_cast %28 : vector<1x128x128xf32> to vector<128x128xf32>
    %cst_26 = arith.constant dense<0.000000e+00> : vector<8x128xf32>
    %30 = tpu.matmul %27, %29, %cst_26 {dimension_numbers = #tpu.dot_dimension_numbers<[1], [0], [0], [1], [0, 0, 1, 1], [], []>} : vector<8x128xf32>, vector<128x128xf32>, vector<8x128xf32> -> vector<8x128xf32>
    %c3 = arith.constant 3 : index
    %c0_27 = arith.constant 0 : index
    %31 = vector.load %arg6[%c3, %c0_27] : memref<4x128xf32, #tpu.memory_space<vmem>>, vector<1x128xf32>
    %32 = vector.broadcast %31 : vector<1x128xf32> to vector<8x128xf32>
    %33 = arith.addf %30, %32 : vector<8x128xf32>
    %cst_28 = arith.constant 0.000000e+00 : f32
    %34 = vector.broadcast %cst_28 : f32 to vector<8x128xf32>
    %35 = arith.maximumf %33, %34 : vector<8x128xf32>
    %c0_29 = arith.constant 0 : index
    %c0_30 = arith.constant 0 : index
    %36 = vector.load %arg7[%c0_29, %c0_30] : memref<8x128xf32, #tpu.memory_space<vmem>>, vector<8x128xf32>
    tpu.vector_store %arg7[%c0_29, %c0_30], %35 {strides = array<i32>} : memref<8x128xf32, #tpu.memory_space<vmem>>, vector<8x128xf32>,
    return
  }
  func.func @transform_0(%arg0: i32) -> (i32, i32) {
    %c0_i32 = arith.constant 0 : i32
    %c0_i32_0 = arith.constant 0 : i32
    return %arg0, %c0_i32 : i32, i32
  }
  func.func @transform_1(%arg0: i32) -> (i32, i32) {
    %c0_i32 = arith.constant 0 : i32
    %c0_i32_0 = arith.constant 0 : i32
    return %arg0, %c0_i32 : i32, i32
  }
  func.func @transform_2(%arg0: i32) -> (i32, i32) {
    %c0_i32 = arith.constant 0 : i32
    %c0_i32_0 = arith.constant 0 : i32
    %c0_i32_1 = arith.constant 0 : i32
    return %c0_i32, %c0_i32_0 : i32, i32
  }
  func.func @transform_3(%arg0: i32) -> (i32, i32) {
    %c0_i32 = arith.constant 0 : i32
    %c0_i32_0 = arith.constant 0 : i32
    %c0_i32_1 = arith.constant 0 : i32
    return %c0_i32, %c0_i32_0 : i32, i32
  }
  func.func @transform_4(%arg0: i32) -> (i32, i32, i32) {
    %c0_i32 = arith.constant 0 : i32
    %c0_i32_0 = arith.constant 0 : i32
    %c0_i32_1 = arith.constant 0 : i32
    %c0_i32_2 = arith.constant 0 : i32
    return %c0_i32, %c0_i32_0, %c0_i32_1 : i32, i32, i32
  }
  func.func @transform_5(%arg0: i32) -> (i32, i32) {
    %c0_i32 = arith.constant 0 : i32
    %c0_i32_0 = arith.constant 0 : i32
    %c0_i32_1 = arith.constant 0 : i32
    return %c0_i32, %c0_i32_0 : i32, i32
  }
  func.func @transform_6(%arg0: i32) -> (i32, i32) {
    %c0_i32 = arith.constant 0 : i32
    %c0_i32_0 = arith.constant 0 : i32
    return %arg0, %c0_i32 : i32, i32
  }
}

</mosaic_0001>

<llo_original>
// kernel: tpu_custom_call.1
$region0: #{tpu_custom_call.1}
  #allocation0 [shape = 'u32[]', space=smem, size = 0x4, offset = 0x4, fixed_abs, tag = 'smem constant byte address 0x4 - core index']
  #allocation1 [shape = 'u32[144,128]{1,0:T(1,128)}', space=vmem, size = 0x12000, scoped, tag = 'internal scratch']
  %s0 = inlined_call_operand.hbm [shape: f32[8,32], index: 0, kind: input, shape index: {}]
  %s1 = inlined_call_operand.hbm [shape: f32[8,16], index: 1, kind: input, shape index: {}]
  %s2 = inlined_call_operand.hbm [shape: f32[32,128], index: 2, kind: input, shape index: {}]
  %s3 = inlined_call_operand.hbm [shape: f32[16,128], index: 3, kind: input, shape index: {}]
  %s4 = inlined_call_operand.hbm [shape: f32[3,128,128], index: 4, kind: input, shape index: {}]
  %s5 = inlined_call_operand.vmem [shape: f32[4,128], index: 5, kind: input, shape index: {}]
  %s6 = inlined_call_operand.hbm [shape: f32[8,128], index: 6, kind: output, shape index: {}]
  %s7 = sld [smem:[#allocation0]]
  $region54: #{tpu_custom_call.1} parent=0
    _
  %s9 = ssub.s32 1, %s7
  %s10 = scalar_select 0, %s9, %s7
  $region1: #{tpu_custom_call.1} parent=0
    #allocation2 [shape = 'u8[4096]{0}', space=vmem, size = 0x1000, scoped, tag = 'input window, operand 0, single buffered']
    #allocation3 [shape = 's32[1]{0}', space=sflag, size = 0x4, scoped, tag = 'scoped memory for tpu_custom_call.1']
    #allocation4 [shape = 's32[1]{0}', space=sflag, size = 0x4, scoped, tag = 'scoped memory for tpu_custom_call.1']
    #allocation5 [shape = 'u8[4096]{0}', space=vmem, size = 0x1000, scoped, tag = 'input window, operand 1, single buffered']
    #allocation6 [shape = 's32[1]{0}', space=sflag, size = 0x4, scoped, tag = 'scoped memory for tpu_custom_call.1']
    #allocation7 [shape = 'u8[16384]{0}', space=vmem, size = 0x4000, scoped, tag = 'input window, operand 2, single buffered']
    #allocation8 [shape = 'u8[8192]{0}', space=vmem, size = 0x2000, scoped, tag = 'input window, operand 3, single buffered']
    #allocation9 [shape = 's32[1]{0}', space=sflag, size = 0x4, scoped, tag = 'scoped memory for tpu_custom_call.1']
    #allocation10 [shape = 'u8[196608]{0}', space=vmem, size = 0x30000, scoped, tag = 'input window, operand 4, single buffered']
    #allocation11 [shape = 'u8[4096]{0}', space=vmem, size = 0x1000, scoped, tag = 'output window, operand 0, single buffered']
    %11 = vsyncpa [#allocation3], 0
    %12 = vsyncpa [#allocation6], 0
    %13 = vsyncpa [#allocation9], 0
    %14 = vsyncpa [#allocation4], 0
    // Predicated region
    $region2: #{tpu_custom_call.1} parent=1 // pred_check
      _
    $region3: #{tpu_custom_call.1} parent=1 // pred_check_branch
      %16 = sbr.rel (0) target = $region5
    $region4: #{tpu_custom_call.1} parent=1 // pred_region
      %s18 = ssub.s32 128, 128
      %19 = vsyncadd [#allocation3], %s18
      %s21 = sshll.u32 [#allocation2], 4
      %s22 = int_to_ptr.vmem [resolvable:$true] %s21
      %24 = dma.hbm_to_vmem [thread:$0]  %s0, 128, %s22, [#allocation3]
    $region5: #{tpu_custom_call.1} parent=1 // pred_fallthru
      _
    // Predicated region
    $region6: #{tpu_custom_call.1} parent=1 // pred_check
      _
    $region7: #{tpu_custom_call.1} parent=1 // pred_check_branch
      %26 = sbr.rel (0) target = $region9
    $region8: #{tpu_custom_call.1} parent=1 // pred_region
      %s28 = ssub.s32 128, 128
      %29 = vsyncadd [#allocation6], %s28
      %s31 = sshll.u32 [#allocation5], 4
      %s32 = int_to_ptr.vmem [resolvable:$true] %s31
      %34 = dma.hbm_to_vmem [thread:$0]  %s1, 128, %s32, [#allocation6]
    $region9: #{tpu_custom_call.1} parent=1 // pred_fallthru
      _
    // Predicated region
    $region10: #{tpu_custom_call.1} parent=1 // pred_check
      _
    $region11: #{tpu_custom_call.1} parent=1 // pred_check_branch
      %36 = sbr.rel (0) target = $region13
    $region12: #{tpu_custom_call.1} parent=1 // pred_region
      %s38 = ssub.s32 512, 512
      %39 = vsyncadd [#allocation6], %s38
      %s40 = sshll.u32 [#allocation7], 4
      %s41 = int_to_ptr.vmem [resolvable:$true] %s40
      %46 = dma.hbm_to_vmem [thread:$0]  %s2, 512, %s41, [#allocation6], 128, 128, 8
    $region13: #{tpu_custom_call.1} parent=1 // pred_fallthru
      _
    // Predicated region
    $region14: #{tpu_custom_call.1} parent=1 // pred_check
      _
    $region15: #{tpu_custom_call.1} parent=1 // pred_check_branch
      %48 = sbr.rel (0) target = $region17
    $region16: #{tpu_custom_call.1} parent=1 // pred_region
      %s50 = ssub.s32 256, 256
      %51 = vsyncadd [#allocation9], %s50
      %s52 = sshll.u32 [#allocation8], 4
      %s53 = int_to_ptr.vmem [resolvable:$true] %s52
      %58 = dma.hbm_to_vmem [thread:$0]  %s3, 256, %s53, [#allocation9], 128, 128, 8
    $region17: #{tpu_custom_call.1} parent=1 // pred_fallthru
      _
    // Predicated region
    $region18: #{tpu_custom_call.1} parent=1 // pred_check
      _
    $region19: #{tpu_custom_call.1} parent=1 // pred_check_branch
      %60 = sbr.rel (0) target = $region21
    $region20: #{tpu_custom_call.1} parent=1 // pred_region
      %s62 = ssub.s32 6144, 6144
      %63 = vsyncadd [#allocation9], %s62
      %s64 = sshll.u32 [#allocation10], 4
      %s65 = int_to_ptr.vmem [resolvable:$true] %s64
      %70 = dma.hbm_to_vmem [thread:$0]  %s4, 6144, %s65, [#allocation9], 128, 128, 8
    $region21: #{tpu_custom_call.1} parent=1 // pred_fallthru
      _
    // Predicated region
    $region22: #{tpu_custom_call.1} parent=1 // pred_check
      _
    $region23: #{tpu_custom_call.1} parent=1 // pred_check_branch
      %72 = sbr.rel (0) target = $region25
    $region24: #{tpu_custom_call.1} parent=1 // pred_region
      _
    $region25: #{tpu_custom_call.1} parent=1 // pred_fallthru
      _
    // Predicated region
    $region26: #{tpu_custom_call.1} parent=1 // pred_check
      _
    $region27: #{tpu_custom_call.1} parent=1 // pred_check_branch
      %74 = sbr.rel (0) target = $region29
    $region28: #{tpu_custom_call.1} parent=1 // pred_region
      %75 = dma.done [#allocation3], 128
    $region29: #{tpu_custom_call.1} parent=1 // pred_fallthru
      _
    // Predicated region
    $region30: #{tpu_custom_call.1} parent=1 // pred_check
      _
    $region31: #{tpu_custom_call.1} parent=1 // pred_check_branch
      %77 = sbr.rel (0) target = $region33
    $region32: #{tpu_custom_call.1} parent=1 // pred_region
      %78 = dma.done [#allocation6], 128
    $region33: #{tpu_custom_call.1} parent=1 // pred_fallthru
      _
    // Predicated region
    $region34: #{tpu_custom_call.1} parent=1 // pred_check
      _
    $region35: #{tpu_custom_call.1} parent=1 // pred_check_branch
      %80 = sbr.rel (0) target = $region37
    $region36: #{tpu_custom_call.1} parent=1 // pred_region
      %81 = dma.done [#allocation6], 512
    $region37: #{tpu_custom_call.1} parent=1 // pred_fallthru
      _
    // Predicated region
    $region38: #{tpu_custom_call.1} parent=1 // pred_check
      _
    $region39: #{tpu_custom_call.1} parent=1 // pred_check_branch
      %83 = sbr.rel (0) target = $region41
    $region40: #{tpu_custom_call.1} parent=1 // pred_region
      %84 = dma.done [#allocation9], 256
    $region41: #{tpu_custom_call.1} parent=1 // pred_fallthru
      _
    // Predicated region
    $region42: #{tpu_custom_call.1} parent=1 // pred_check
      _
    $region43: #{tpu_custom_call.1} parent=1 // pred_check_branch
      %86 = sbr.rel (0) target = $region45
    $region44: #{tpu_custom_call.1} parent=1 // pred_region
      %87 = dma.done [#allocation9], 6144
    $region45: #{tpu_custom_call.1} parent=1 // pred_fallthru
      _
    %v88 = vld [vmem:[#allocation2] sm:$0xff]
    %v89 = vld [vmem:[#allocation7] sm:$0xff]
    %v90 = vld [vmem:[#allocation7 + $0x8] sm:$0xff]
    %v91 = vld [vmem:[#allocation7 + $0x10] sm:$0xff]
    %v92 = vld [vmem:[#allocation7 + $0x18] sm:$0xff]
    %v93 = vld [vmem:[#allocation5] sm:$0xff]
    %v94 = vld [vmem:[#allocation8] sm:$0xff]
    %v95 = vld [vmem:[#allocation8 + $0x8] sm:$0xff]
    %vm96 = vcmask 130048
    %v98 = vsel %vm96, %v93, 0
    %100 = vmatprep.subr.mxu0 0.0
    %101 = vmatpush1.msra.mxu0 %v94
    %102 = vmatprep.subr.mxu0 0.0
    %103 = vmatpush1.msra.mxu0 %v95
    %104 = vmatprep.subr.mxu0 0.0
    %105 = vmatpush1.msra.mxu0 0.0
    %106 = vmatprep.subr.mxu0 0.0
    %107 = vmatpush1.msra.mxu0 0.0
    %108 = vmatprep.subr.mxu0 0.0
    %109 = vmatpush1.msra.mxu0 0.0
    %110 = vmatprep.subr.mxu0 0.0
    %111 = vmatpush1.msra.mxu0 0.0
    %112 = vmatprep.subr.mxu0 0.0
    %113 = vmatpush1.msra.mxu0 0.0
    %114 = vmatprep.subr.mxu0 0.0
    %115 = vmatpush1.msra.mxu0 0.0
    %116 = vmatprep.subr.mxu0 0.0
    %117 = vmatpush1.msra.mxu0 0.0
    %118 = vmatprep.subr.mxu0 0.0
    %119 = vmatpush1.msra.mxu0 0.0
    %120 = vmatprep.subr.mxu0 0.0
    %121 = vmatpush1.msra.mxu0 0.0
    %122 = vmatprep.subr.mxu0 0.0
    %123 = vmatpush1.msra.mxu0 0.0
    %124 = vmatprep.subr.mxu0 0.0
    %125 = vmatpush1.msra.mxu0 0.0
    %126 = vmatprep.subr.mxu0 0.0
    %127 = vmatpush1.msra.mxu0 0.0
    %128 = vmatprep.subr.mxu0 0.0
    %129 = vmatpush1.msra.mxu0 0.0
    %130 = vmatprep.subr.mxu0 0.0
    %131 = vmatpush1.msra.mxu0 0.0
    %132 = vmatprep.subr.mxu0 0.0
    %133 = vmatpush1.msra.mxu0 0.0
    %134 = vmatprep.subr.mxu0 0.0
    %135 = vmatpush1.msra.mxu0 0.0
    %136 = vmatprep.subr.mxu0 0.0
    %137 = vmatpush1.msra.mxu0 0.0
    %138 = vmatprep.subr.mxu0 0.0
    %139 = vmatpush1.msra.mxu0 0.0
    %140 = vmatprep.subr.mxu0 0.0
    %141 = vmatpush1.msra.mxu0 0.0
    %142 = vmatprep.subr.mxu0 0.0
    %143 = vmatpush1.msra.mxu0 0.0
    %144 = vmatprep.subr.mxu0 0.0
    %145 = vmatpush1.msra.mxu0 0.0
    %146 = vmatprep.subr.mxu0 0.0
    %147 = vmatpush1.msra.mxu0 0.0
    %148 = vmatprep.subr.mxu0 0.0
    %149 = vmatpush1.msra.mxu0 0.0
    %150 = vmatprep.subr.mxu0 0.0
    %151 = vmatpush1.msra.mxu0 0.0
    %152 = vmatprep.subr.mxu0 0.0
    %153 = vmatpush1.msra.mxu0 0.0
    %154 = vmatprep.subr.mxu0 0.0
    %155 = vmatpush1.msra.mxu0 0.0
    %156 = vmatprep.subr.mxu0 0.0
    %157 = vmatpush1.msra.mxu0 0.0
    %158 = vmatprep.subr.mxu0 0.0
    %159 = vmatpush1.msra.mxu0 0.0
    %160 = vmatprep.subr.mxu0 0.0
    %161 = vmatpush1.msra.mxu0 0.0
    %162 = vmatprep.subr.mxu0 0.0
    %163 = vmatpush1.msra.mxu0 0.0
    %164 = vmatprep.mubr.f32.mxu0 0.0
    %165 = vmatmul.mubr.f32.gmra.mrb[0].mxu0 %v98
    %v166 = vpop.f32.mrb[0].mxu0
    %v167 = vadd.f32 0.0, %v166
    %v168 = vpop.f32.mrb[0].mxu0
    %169 = vdwg.mxu0
    %vm170 = vcmask 261120
    %v172 = vsel %vm170, %v88, 0
    %174 = vmatprep.subr.mxu0 0.0
    %175 = vmatpush1.msra.mxu0 %v89
    %176 = vmatprep.subr.mxu0 0.0
    %177 = vmatpush1.msra.mxu0 %v90
    %178 = vmatprep.subr.mxu0 0.0
    %179 = vmatpush1.msra.mxu0 %v91
    %180 = vmatprep.subr.mxu0 0.0
    %181 = vmatpush1.msra.mxu0 %v92
    %182 = vmatprep.subr.mxu0 0.0
    %183 = vmatpush1.msra.mxu0 0.0
    %184 = vmatprep.subr.mxu0 0.0
    %185 = vmatpush1.msra.mxu0 0.0
    %186 = vmatprep.subr.mxu0 0.0
    %187 = vmatpush1.msra.mxu0 0.0
    %188 = vmatprep.subr.mxu0 0.0
    %189 = vmatpush1.msra.mxu0 0.0
    %190 = vmatprep.subr.mxu0 0.0
    %191 = vmatpush1.msra.mxu0 0.0
    %192 = vmatprep.subr.mxu0 0.0
    %193 = vmatpush1.msra.mxu0 0.0
    %194 = vmatprep.subr.mxu0 0.0
    %195 = vmatpush1.msra.mxu0 0.0
    %196 = vmatprep.subr.mxu0 0.0
    %197 = vmatpush1.msra.mxu0 0.0
    %198 = vmatprep.subr.mxu0 0.0
    %199 = vmatpush1.msra.mxu0 0.0
    %200 = vmatprep.subr.mxu0 0.0
    %201 = vmatpush1.msra.mxu0 0.0
    %202 = vmatprep.subr.mxu0 0.0
    %203 = vmatpush1.msra.mxu0 0.0
    %204 = vmatprep.subr.mxu0 0.0
    %205 = vmatpush1.msra.mxu0 0.0
    %206 = vmatprep.subr.mxu0 0.0
    %207 = vmatpush1.msra.mxu0 0.0
    %208 = vmatprep.subr.mxu0 0.0
    %209 = vmatpush1.msra.mxu0 0.0
    %210 = vmatprep.subr.mxu0 0.0
    %211 = vmatpush1.msra.mxu0 0.0
    %212 = vmatprep.subr.mxu0 0.0
    %213 = vmatpush1.msra.mxu0 0.0
    %214 = vmatprep.subr.mxu0 0.0
    %215 = vmatpush1.msra.mxu0 0.0
    %216 = vmatprep.subr.mxu0 0.0
    %217 = vmatpush1.msra.mxu0 0.0
    %218 = vmatprep.subr.mxu0 0.0
    %219 = vmatpush1.msra.mxu0 0.0
    %220 = vmatprep.subr.mxu0 0.0
    %221 = vmatpush1.msra.mxu0 0.0
    %222 = vmatprep.subr.mxu0 0.0
    %223 = vmatpush1.msra.mxu0 0.0
    %224 = vmatprep.subr.mxu0 0.0
    %225 = vmatpush1.msra.mxu0 0.0
    %226 = vmatprep.subr.mxu0 0.0
    %227 = vmatpush1.msra.mxu0 0.0
    %228 = vmatprep.subr.mxu0 0.0
    %229 = vmatpush1.msra.mxu0 0.0
    %230 = vmatprep.subr.mxu0 0.0
    %231 = vmatpush1.msra.mxu0 0.0
    %232 = vmatprep.subr.mxu0 0.0
    %233 = vmatpush1.msra.mxu0 0.0
    %234 = vmatprep.subr.mxu0 0.0
    %235 = vmatpush1.msra.mxu0 0.0
    %236 = vmatprep.subr.mxu0 0.0
    %237 = vmatpush1.msra.mxu0 0.0
    %238 = vmatprep.mubr.f32.mxu0 0.0
    %239 = vmatmul.mubr.f32.gmra.mrb[0].mxu0 %v172
    %v240 = vpop.f32.mrb[0].mxu0
    %v241 = vadd.f32 %v167, %v240
    %v242 = vpop.f32.mrb[0].mxu0
    %243 = vdwg.mxu0
    %v244 = vld [vmem:[%s5] sm:$0x1]
    %v245 = vlaneseq
    %v246 = vshrl.u32 %v245, 7
    %v247 = vsub.s32 0, %v246
    %v248 = vrot.slane %v244, %v247
    %v249 = vadd.f32 %v241, %v248
    %v250 = vmax.f32 %v249, 0.0
    %v251 = vld [vmem:[#allocation10] sm:$0xff]
    %v252 = vld [vmem:[#allocation10 + $0x8] sm:$0xff]
    %v253 = vld [vmem:[#allocation10 + $0x10] sm:$0xff]
    %v254 = vld [vmem:[#allocation10 + $0x18] sm:$0xff]
    %v255 = vld [vmem:[#allocation10 + $0x20] sm:$0xff]
    %v256 = vld [vmem:[#allocation10 + $0x28] sm:$0xff]
    %v257 = vld [vmem:[#allocation10 + $0x30] sm:$0xff]
    %v258 = vld [vmem:[#allocation10 + $0x38] sm:$0xff]
    %v259 = vld [vmem:[#allocation10 + $0x40] sm:$0xff]
    %v260 = vld [vmem:[#allocation10 + $0x48] sm:$0xff]
    %v261 = vld [vmem:[#allocation10 + $0x50] sm:$0xff]
    %v262 = vld [vmem:[#allocation10 + $0x58] sm:$0xff]
    %v263 = vld [vmem:[#allocation10 + $0x60] sm:$0xff]
    %v264 = vld [vmem:[#allocation10 + $0x68] sm:$0xff]
    %v265 = vld [vmem:[#allocation10 + $0x70] sm:$0xff]
    %v266 = vld [vmem:[#allocation10 + $0x78] sm:$0xff]
    %v267 = vld [vmem:[%s5 + $0x1] sm:$0x1]
    %v268 = vlaneseq
    %v269 = vshrl.u32 %v268, 7
    %v270 = vsub.s32 0, %v269
    %v271 = vrot.slane %v267, %v270
    %272 = vmatprep.subr.mxu0 0.0
    %273 = vmatpush1.msra.mxu0 %v251
    %274 = vmatprep.subr.mxu0 0.0
    %275 = vmatpush1.msra.mxu0 %v252
    %276 = vmatprep.subr.mxu0 0.0
    %277 = vmatpush1.msra.mxu0 %v253
    %278 = vmatprep.subr.mxu0 0.0
    %279 = vmatpush1.msra.mxu0 %v254
    %280 = vmatprep.subr.mxu0 0.0
    %281 = vmatpush1.msra.mxu0 %v255
    %282 = vmatprep.subr.mxu0 0.0
    %283 = vmatpush1.msra.mxu0 %v256
    %284 = vmatprep.subr.mxu0 0.0
    %285 = vmatpush1.msra.mxu0 %v257
    %286 = vmatprep.subr.mxu0 0.0
    %287 = vmatpush1.msra.mxu0 %v258
    %288 = vmatprep.subr.mxu0 0.0
    %289 = vmatpush1.msra.mxu0 %v259
    %290 = vmatprep.subr.mxu0 0.0
    %291 = vmatpush1.msra.mxu0 %v260
    %292 = vmatprep.subr.mxu0 0.0
    %293 = vmatpush1.msra.mxu0 %v261
    %294 = vmatprep.subr.mxu0 0.0
    %295 = vmatpush1.msra.mxu0 %v262
    %296 = vmatprep.subr.mxu0 0.0
    %297 = vmatpush1.msra.mxu0 %v263
    %298 = vmatprep.subr.mxu0 0.0
    %299 = vmatpush1.msra.mxu0 %v264
    %300 = vmatprep.subr.mxu0 0.0
    %301 = vmatpush1.msra.mxu0 %v265
    %302 = vmatprep.subr.mxu0 0.0
    %303 = vmatpush1.msra.mxu0 %v266
    %304 = vmatprep.subr.mxu0 0.0
    %305 = vmatpush1.msra.mxu0 0.0
    %306 = vmatprep.subr.mxu0 0.0
    %307 = vmatpush1.msra.mxu0 0.0
    %308 = vmatprep.subr.mxu0 0.0
    %309 = vmatpush1.msra.mxu0 0.0
    %310 = vmatprep.subr.mxu0 0.0
    %311 = vmatpush1.msra.mxu0 0.0
    %312 = vmatprep.subr.mxu0 0.0
    %313 = vmatpush1.msra.mxu0 0.0
    %314 = vmatprep.subr.mxu0 0.0
    %315 = vmatpush1.msra.mxu0 0.0
    %316 = vmatprep.subr.mxu0 0.0
    %317 = vmatpush1.msra.mxu0 0.0
    %318 = vmatprep.subr.mxu0 0.0
    %319 = vmatpush1.msra.mxu0 0.0
    %320 = vmatprep.subr.mxu0 0.0
    %321 = vmatpush1.msra.mxu0 0.0
    %322 = vmatprep.subr.mxu0 0.0
    %323 = vmatpush1.msra.mxu0 0.0
    %324 = vmatprep.subr.mxu0 0.0
    %325 = vmatpush1.msra.mxu0 0.0
    %326 = vmatprep.subr.mxu0 0.0
    %327 = vmatpush1.msra.mxu0 0.0
    %328 = vmatprep.subr.mxu0 0.0
    %329 = vmatpush1.msra.mxu0 0.0
    %330 = vmatprep.subr.mxu0 0.0
    %331 = vmatpush1.msra.mxu0 0.0
    %332 = vmatprep.subr.mxu0 0.0
    %333 = vmatpush1.msra.mxu0 0.0
    %334 = vmatprep.subr.mxu0 0.0
    %335 = vmatpush1.msra.mxu0 0.0
    %336 = vmatprep.mubr.f32.mxu0 0.0
    %337 = vmatmul.mubr.f32.gmra.mrb[0].mxu0 %v250
    %v338 = vpop.f32.mrb[0].mxu0
    %v339 = vadd.f32 %v271, %v338
    %v340 = vpop.f32.mrb[0].mxu0
    %341 = vdwg.mxu0
    %v342 = vmax.f32 %v339, 0.0
    %s343 = scalar_lea.vmem [#allocation10], 128
    %v344 = vld [vmem:[%s343] sm:$0xff]
    %v345 = vld [vmem:[%s343 + $0x8] sm:$0xff]
    %v346 = vld [vmem:[%s343 + $0x10] sm:$0xff]
    %v347 = vld [vmem:[%s343 + $0x18] sm:$0xff]
    %v348 = vld [vmem:[%s343 + $0x20] sm:$0xff]
    %v349 = vld [vmem:[%s343 + $0x28] sm:$0xff]
    %v350 = vld [vmem:[%s343 + $0x30] sm:$0xff]
    %v351 = vld [vmem:[%s343 + $0x38] sm:$0xff]
    %v352 = vld [vmem:[%s343 + $0x40] sm:$0xff]
    %v353 = vld [vmem:[%s343 + $0x48] sm:$0xff]
    %v354 = vld [vmem:[%s343 + $0x50] sm:$0xff]
    %v355 = vld [vmem:[%s343 + $0x58] sm:$0xff]
    %v356 = vld [vmem:[%s343 + $0x60] sm:$0xff]
    %v357 = vld [vmem:[%s343 + $0x68] sm:$0xff]
    %v358 = vld [vmem:[%s343 + $0x70] sm:$0xff]
    %v359 = vld [vmem:[%s343 + $0x78] sm:$0xff]
    %v360 = vld [vmem:[%s5 + $0x2] sm:$0x1]
    %v361 = vlaneseq
    %v362 = vshrl.u32 %v361, 7
    %v363 = vsub.s32 0, %v362
    %v364 = vrot.slane %v360, %v363
    %365 = vmatprep.subr.mxu0 0.0
    %366 = vmatpush1.msra.mxu0 %v344
    %367 = vmatprep.subr.mxu0 0.0
    %368 = vmatpush1.msra.mxu0 %v345
    %369 = vmatprep.subr.mxu0 0.0
    %370 = vmatpush1.msra.mxu0 %v346
    %371 = vmatprep.subr.mxu0 0.0
    %372 = vmatpush1.msra.mxu0 %v347
    %373 = vmatprep.subr.mxu0 0.0
    %374 = vmatpush1.msra.mxu0 %v348
    %375 = vmatprep.subr.mxu0 0.0
    %376 = vmatpush1.msra.mxu0 %v349
    %377 = vmatprep.subr.mxu0 0.0
    %378 = vmatpush1.msra.mxu0 %v350
    %379 = vmatprep.subr.mxu0 0.0
    %380 = vmatpush1.msra.mxu0 %v351
    %381 = vmatprep.subr.mxu0 0.0
    %382 = vmatpush1.msra.mxu0 %v352
    %383 = vmatprep.subr.mxu0 0.0
    %384 = vmatpush1.msra.mxu0 %v353
    %385 = vmatprep.subr.mxu0 0.0
    %386 = vmatpush1.msra.mxu0 %v354
    %387 = vmatprep.subr.mxu0 0.0
    %388 = vmatpush1.msra.mxu0 %v355
    %389 = vmatprep.subr.mxu0 0.0
    %390 = vmatpush1.msra.mxu0 %v356
    %391 = vmatprep.subr.mxu0 0.0
    %392 = vmatpush1.msra.mxu0 %v357
    %393 = vmatprep.subr.mxu0 0.0
    %394 = vmatpush1.msra.mxu0 %v358
    %395 = vmatprep.subr.mxu0 0.0
    %396 = vmatpush1.msra.mxu0 %v359
    %397 = vmatprep.subr.mxu0 0.0
    %398 = vmatpush1.msra.mxu0 0.0
    %399 = vmatprep.subr.mxu0 0.0
    %400 = vmatpush1.msra.mxu0 0.0
    %401 = vmatprep.subr.mxu0 0.0
    %402 = vmatpush1.msra.mxu0 0.0
    %403 = vmatprep.subr.mxu0 0.0
    %404 = vmatpush1.msra.mxu0 0.0
    %405 = vmatprep.subr.mxu0 0.0
    %406 = vmatpush1.msra.mxu0 0.0
    %407 = vmatprep.subr.mxu0 0.0
    %408 = vmatpush1.msra.mxu0 0.0
    %409 = vmatprep.subr.mxu0 0.0
    %410 = vmatpush1.msra.mxu0 0.0
    %411 = vmatprep.subr.mxu0 0.0
    %412 = vmatpush1.msra.mxu0 0.0
    %413 = vmatprep.subr.mxu0 0.0
    %414 = vmatpush1.msra.mxu0 0.0
    %415 = vmatprep.subr.mxu0 0.0
    %416 = vmatpush1.msra.mxu0 0.0
    %417 = vmatprep.subr.mxu0 0.0
    %418 = vmatpush1.msra.mxu0 0.0
    %419 = vmatprep.subr.mxu0 0.0
    %420 = vmatpush1.msra.mxu0 0.0
    %421 = vmatprep.subr.mxu0 0.0
    %422 = vmatpush1.msra.mxu0 0.0
    %423 = vmatprep.subr.mxu0 0.0
    %424 = vmatpush1.msra.mxu0 0.0
    %425 = vmatprep.subr.mxu0 0.0
    %426 = vmatpush1.msra.mxu0 0.0
    %427 = vmatprep.subr.mxu0 0.0
    %428 = vmatpush1.msra.mxu0 0.0
    %429 = vmatprep.mubr.f32.mxu0 0.0
    %430 = vmatmul.mubr.f32.gmra.mrb[0].mxu0 %v342
    %v431 = vpop.f32.mrb[0].mxu0
    %v432 = vadd.f32 %v364, %v431
    %v433 = vpop.f32.mrb[0].mxu0
    %434 = vdwg.mxu0
    %v435 = vmax.f32 %v432, 0.0
    %s436 = scalar_lea.vmem [#allocation10], 256
    %v437 = vld [vmem:[%s436] sm:$0xff]
    %v438 = vld [vmem:[%s436 + $0x8] sm:$0xff]
    %v439 = vld [vmem:[%s436 + $0x10] sm:$0xff]
    %v440 = vld [vmem:[%s436 + $0x18] sm:$0xff]
    %v441 = vld [vmem:[%s436 + $0x20] sm:$0xff]
    %v442 = vld [vmem:[%s436 + $0x28] sm:$0xff]
    %v443 = vld [vmem:[%s436 + $0x30] sm:$0xff]
    %v444 = vld [vmem:[%s436 + $0x38] sm:$0xff]
    %v445 = vld [vmem:[%s436 + $0x40] sm:$0xff]
    %v446 = vld [vmem:[%s436 + $0x48] sm:$0xff]
    %v447 = vld [vmem:[%s436 + $0x50] sm:$0xff]
    %v448 = vld [vmem:[%s436 + $0x58] sm:$0xff]
    %v449 = vld [vmem:[%s436 + $0x60] sm:$0xff]
    %v450 = vld [vmem:[%s436 + $0x68] sm:$0xff]
    %v451 = vld [vmem:[%s436 + $0x70] sm:$0xff]
    %v452 = vld [vmem:[%s436 + $0x78] sm:$0xff]
    %v453 = vld [vmem:[%s5 + $0x3] sm:$0x1]
    %v454 = vlaneseq
    %v455 = vshrl.u32 %v454, 7
    %v456 = vsub.s32 0, %v455
    %v457 = vrot.slane %v453, %v456
    %458 = vmatprep.subr.mxu0 0.0
    %459 = vmatpush1.msra.mxu0 %v437
    %460 = vmatprep.subr.mxu0 0.0
    %461 = vmatpush1.msra.mxu0 %v438
    %462 = vmatprep.subr.mxu0 0.0
    %463 = vmatpush1.msra.mxu0 %v439
    %464 = vmatprep.subr.mxu0 0.0
    %465 = vmatpush1.msra.mxu0 %v440
    %466 = vmatprep.subr.mxu0 0.0
    %467 = vmatpush1.msra.mxu0 %v441
    %468 = vmatprep.subr.mxu0 0.0
    %469 = vmatpush1.msra.mxu0 %v442
    %470 = vmatprep.subr.mxu0 0.0
    %471 = vmatpush1.msra.mxu0 %v443
    %472 = vmatprep.subr.mxu0 0.0
    %473 = vmatpush1.msra.mxu0 %v444
    %474 = vmatprep.subr.mxu0 0.0
    %475 = vmatpush1.msra.mxu0 %v445
    %476 = vmatprep.subr.mxu0 0.0
    %477 = vmatpush1.msra.mxu0 %v446
    %478 = vmatprep.subr.mxu0 0.0
    %479 = vmatpush1.msra.mxu0 %v447
    %480 = vmatprep.subr.mxu0 0.0
    %481 = vmatpush1.msra.mxu0 %v448
    %482 = vmatprep.subr.mxu0 0.0
    %483 = vmatpush1.msra.mxu0 %v449
    %484 = vmatprep.subr.mxu0 0.0
    %485 = vmatpush1.msra.mxu0 %v450
    %486 = vmatprep.subr.mxu0 0.0
    %487 = vmatpush1.msra.mxu0 %v451
    %488 = vmatprep.subr.mxu0 0.0
    %489 = vmatpush1.msra.mxu0 %v452
    %490 = vmatprep.subr.mxu0 0.0
    %491 = vmatpush1.msra.mxu0 0.0
    %492 = vmatprep.subr.mxu0 0.0
    %493 = vmatpush1.msra.mxu0 0.0
    %494 = vmatprep.subr.mxu0 0.0
    %495 = vmatpush1.msra.mxu0 0.0
    %496 = vmatprep.subr.mxu0 0.0
    %497 = vmatpush1.msra.mxu0 0.0
    %498 = vmatprep.subr.mxu0 0.0
    %499 = vmatpush1.msra.mxu0 0.0
    %500 = vmatprep.subr.mxu0 0.0
    %501 = vmatpush1.msra.mxu0 0.0
    %502 = vmatprep.subr.mxu0 0.0
    %503 = vmatpush1.msra.mxu0 0.0
    %504 = vmatprep.subr.mxu0 0.0
    %505 = vmatpush1.msra.mxu0 0.0
    %506 = vmatprep.subr.mxu0 0.0
    %507 = vmatpush1.msra.mxu0 0.0
    %508 = vmatprep.subr.mxu0 0.0
    %509 = vmatpush1.msra.mxu0 0.0
    %510 = vmatprep.subr.mxu0 0.0
    %511 = vmatpush1.msra.mxu0 0.0
    %512 = vmatprep.subr.mxu0 0.0
    %513 = vmatpush1.msra.mxu0 0.0
    %514 = vmatprep.subr.mxu0 0.0
    %515 = vmatpush1.msra.mxu0 0.0
    %516 = vmatprep.subr.mxu0 0.0
    %517 = vmatpush1.msra.mxu0 0.0
    %518 = vmatprep.subr.mxu0 0.0
    %519 = vmatpush1.msra.mxu0 0.0
    %520 = vmatprep.subr.mxu0 0.0
    %521 = vmatpush1.msra.mxu0 0.0
    %522 = vmatprep.mubr.f32.mxu0 0.0
    %523 = vmatmul.mubr.f32.gmra.mrb[0].mxu0 %v435
    %v524 = vpop.f32.mrb[0].mxu0
    %v525 = vadd.f32 %v457, %v524
    %v526 = vpop.f32.mrb[0].mxu0
    %527 = vdwg.mxu0
    %v528 = vmax.f32 %v525, 0.0
    %529 = vst [vmem:[#allocation11] sm:$0xff] %v528
    // Predicated region
    $region46: #{tpu_custom_call.1} parent=1 // pred_check
      _
    $region47: #{tpu_custom_call.1} parent=1 // pred_check_branch
      %531 = sbr.rel (0) target = $region49
    $region48: #{tpu_custom_call.1} parent=1 // pred_region
      %s533 = ssub.s32 128, 128
      %534 = vsyncadd [#allocation4], %s533
      %s536 = sshll.u32 [#allocation11], 4
      %s537 = int_to_ptr.vmem [resolvable:$true] %s536
      %539 = dma.vmem_to_hbm [thread:$0]  %s537, 128, %s6, [#allocation4]
    $region49: #{tpu_custom_call.1} parent=1 // pred_fallthru
      _
    // Predicated region
    $region50: #{tpu_custom_call.1} parent=1 // pred_check
      _
    $region51: #{tpu_custom_call.1} parent=1 // pred_check_branch
      %541 = sbr.rel (0) target = $region53
    $region52: #{tpu_custom_call.1} parent=1 // pred_region
      %542 = dma.done [#allocation4], 128
    $region53: #{tpu_custom_call.1} parent=1 // pred_fallthru
      _
    %543 = vsyncpa [#allocation3], 1
    %544 = vsyncpa [#allocation6], 1
    %545 = vsyncpa [#allocation9], 1
    %546 = vsyncpa [#allocation4], 1

</llo_original>
